<compile_context>
chip_gen: v7x
topology: tpu7x:2x2x1
jax: 0.10.0
libtpu: 0.0.40
codegen_flags: <defaults>
</compile_context>

<pallas_src>
import functools

import jax
import jax.numpy as jnp
from jax.experimental import pallas as pl
from jax.experimental.pallas import tpu as pltpu


def _round_up(n, m):
    return ((n + m - 1) // m) * m


def ensemble_kernel(x_ref, w_ref, b_ref, out_ref, *, num_models, num_classes):
    x = x_ref[...]                       # (Bp, F)   bf16
    w = w_ref[...]                       # (F, LW)   bf16, zero-padded past M*NC
    b = b_ref[...]                       # (1, LW)   f32,  zero-padded past M*NC

    # One lane-dense MXU matmul for all models (N padded to a full 128-lane width).
    logits = jnp.dot(x, w, preferred_element_type=jnp.float32) + b   # (Bp, LW) f32

    M, NC = num_models, num_classes
    MNC = M * NC
    Bp, lw = logits.shape

    acc_scale = jnp.zeros((Bp, NC), jnp.float32)
    acc_old = jnp.zeros((Bp, NC), jnp.float32)

    # M is tiny and static -> unrolled straight-line code over lane sub-slices.
    for m_i in range(M):
        lg = logits[:, m_i * NC:(m_i + 1) * NC]                      # (Bp, NC)

        # get_output_scale: top1 - top2 with torch.topk tie semantics: if the max is
        # duplicated, the second topk value equals it -> diff == 0 -> NaN softmax.
        m1 = jnp.max(lg, axis=-1, keepdims=True)                     # (Bp, 1)
        is_max = lg >= m1
        n_max = jnp.sum(is_max.astype(jnp.float32), axis=-1, keepdims=True)
        m2_distinct = jnp.max(jnp.where(is_max, -jnp.inf, lg), axis=-1, keepdims=True)
        m2 = jnp.where(n_max > 1.0, m1, m2_distinct)
        diff = m1 - m2

        # Exact reciprocal for diff (feeds the exponent; error amplified 10x on the
        # value=10 path).  max(z) == 0 by construction -> no extra max-subtract in softmax.
        z = (lg - m1) * (1.0 / diff)                                  # (Bp, NC)
        e1 = jnp.exp(z)                                               # value = 1 numerator
        # value = 10 numerator: exp(10*z) == e1**10; trade a second EUP exp for VPU muls.
        e2 = e1 * e1
        e4 = e2 * e2
        e8 = e4 * e4
        e10 = e8 * e2

        acc_scale = acc_scale + e1 * pl.reciprocal(
            jnp.sum(e1, axis=-1, keepdims=True), approx=True)
        acc_old = acc_old + e10 * pl.reciprocal(
            jnp.sum(e10, axis=-1, keepdims=True), approx=True)

    inv_m = 1.0 / M
    # 1e-80 underflows to 0 in f32 (same as fp32 torch clamp) -> log(0) == -inf possible.
    log_scale = jnp.log(jnp.maximum(acc_scale * inv_m, 1e-80))
    log_old = jnp.log(jnp.maximum(acc_old * inv_m, 1e-80))

    # Assemble one lane-dense (Bp, LW) slab -> single unmasked full-width store, one DMA.
    pad = lw - (MNC + 2 * NC)
    pieces = [logits[:, :MNC], log_scale, log_old]
    if pad > 0:
        pieces.append(jnp.zeros((Bp, pad), jnp.float32))
    out_ref[...] = jnp.concatenate(pieces, axis=-1)


def prepare_ensemble_params(weights, biases):
    """One-time (init-path) parameter fusion: weights (M,F,NC), biases (M,1,NC) ->
    lane-dense, zero-padded, bf16 fused operands."""
    M, F, NC = weights.shape
    lw = _round_up(M * NC + 2 * NC, 128)          # shared lane width for weights + out slab
    w = jnp.transpose(weights, (1, 0, 2)).reshape(F, M * NC)
    w = jnp.pad(w, ((0, 0), (0, lw - M * NC))).astype(jnp.bfloat16)      # (F, LW)
    b = jnp.pad(biases.reshape(1, M * NC).astype(jnp.float32),
                ((0, 0), (0, lw - M * NC)))                               # (1, LW)
    return w, b


@functools.partial(jax.jit, static_argnames=("num_models", "num_classes"))
def ensemble_forward(x_nchw, w_fused, b_fused, *, num_models, num_classes):
    """x_nchw: (B, C, H, W) f32. w_fused/b_fused from prepare_ensemble_params."""
    B = x_nchw.shape[0]
    F, lw = w_fused.shape
    M, NC = num_models, num_classes
    MNC = M * NC

    # Pad the batch to the f32 sublane height (8) so every vreg row / MXU push is useful;
    # padded rows are sliced off below (their NaNs/infs never touch real rows).
    Bp = max(8, _round_up(B, 8))
    x_flat = x_nchw.reshape(B, -1).astype(jnp.bfloat16)                   # (B, F)
    if Bp != B:
        x_flat = jnp.pad(x_flat, ((0, Bp - B), (0, 0)))

    # Whole problem (~300 KB) fits VMEM on v5e/v6e/v7x -> single invocation, no grid.
    slab = pl.pallas_call(
        functools.partial(ensemble_kernel, num_models=M, num_classes=NC),
        out_shape=jax.ShapeDtypeStruct((Bp, lw), jnp.float32),
        in_specs=[
            pl.BlockSpec(memory_space=pltpu.MemorySpace.VMEM),
            pl.BlockSpec(memory_space=pltpu.MemorySpace.VMEM),
            pl.BlockSpec(memory_space=pltpu.MemorySpace.VMEM),
        ],
        out_specs=pl.BlockSpec(memory_space=pltpu.MemorySpace.VMEM),
        cost_estimate=pl.CostEstimate(
            flops=2 * Bp * F * lw,
            transcendentals=Bp * NC * (M + 2),
            bytes_accessed=Bp * F * 2 + F * lw * 2 + lw * 4 + Bp * lw * 4,
        ),
    )(x_flat, w_fused, b_fused)

    # Pure-JAX split of the lane-dense slab (drops padded rows / lanes).
    slab = slab[:B]
    outputs = [slab[:, m * NC:(m + 1) * NC] for m in range(M)]   # per-model logits
    outputs.append(slab[:, MNC:MNC + NC])                        # output_scale
    outputs.append(slab[:, MNC + NC:MNC + 2 * NC])               # output_old
    return outputs


if __name__ == "__main__":
    # Small shapes consistent with the module: batch=2, channels=4, spatial=16,
    # num_classes=16 (>= 10 so topk(10) in get_output_scale is well defined).
    B, C, H, W = 2, 4, 16, 16
    NUM_MODELS = 3
    NUM_CLASSES = 16
    F = C * H * W

    key = jax.random.PRNGKey(0)
    kx, kw, kb = jax.random.split(key, 3)

    x = jax.random.normal(kx, (B, C, H, W), dtype=jnp.float32)
    # Deterministic synthetic sub-model parameters (one linear classifier per model).
    weights = 0.02 * jax.random.normal(kw, (NUM_MODELS, F, NUM_CLASSES), dtype=jnp.float32)
    biases = 0.01 * jax.random.normal(kb, (NUM_MODELS, 1, NUM_CLASSES), dtype=jnp.float32)

    # One-time parameter fusion (init path, not per-forward).
    w_fused, b_fused = prepare_ensemble_params(weights, biases)

    outs = ensemble_forward(x, w_fused, b_fused,
                            num_models=NUM_MODELS, num_classes=NUM_CLASSES)
    for o in outs:
        jax.block_until_ready(o)
    print("KERNEL_OK")
</pallas_src>

<mosaic_0001>
module attributes {stable_mosaic.version = 11 : i64} {
  func.func @ensemble_kernel(%arg0: memref<8x1024xbf16, #tpu.memory_space<vmem>>, %arg1: memref<1024x128xbf16, #tpu.memory_space<vmem>>, %arg2: memref<1x128xf32, #tpu.memory_space<vmem>>, %arg3: memref<8x128xf32, #tpu.memory_space<vmem>>) attributes {dimension_semantics = [], scalar_prefetch = 0 : i64, scratch_operands = 0 : i64, tpu.core_type = #tpu.core_type<tc>} {
    %c0 = arith.constant 0 : index
    %c0_0 = arith.constant 0 : index
    %0 = vector.load %arg0[%c0, %c0_0] : memref<8x1024xbf16, #tpu.memory_space<vmem>>, vector<8x1024xbf16>
    %c0_1 = arith.constant 0 : index
    %c0_2 = arith.constant 0 : index
    %1 = vector.load %arg1[%c0_1, %c0_2] : memref<1024x128xbf16, #tpu.memory_space<vmem>>, vector<1024x128xbf16>
    %c0_3 = arith.constant 0 : index
    %c0_4 = arith.constant 0 : index
    %2 = vector.load %arg2[%c0_3, %c0_4] : memref<1x128xf32, #tpu.memory_space<vmem>>, vector<1x128xf32>
    %cst = arith.constant dense<0.000000e+00> : vector<8x128xf32>
    %3 = tpu.matmul %0, %1, %cst {dimension_numbers = #tpu.dot_dimension_numbers<[1], [0], [0], [1], [0, 0, 1, 1], [], []>} : vector<8x1024xbf16>, vector<1024x128xbf16>, vector<8x128xf32> -> vector<8x128xf32>
    %4 = vector.broadcast %2 : vector<1x128xf32> to vector<8x128xf32>
    %5 = arith.addf %3, %4 : vector<8x128xf32>
    %cst_5 = arith.constant 0.000000e+00 : f32
    %6 = vector.broadcast %cst_5 : f32 to vector<8x16xf32>
    %cst_6 = arith.constant 0.000000e+00 : f32
    %7 = vector.broadcast %cst_6 : f32 to vector<8x16xf32>
    %8 = vector.extract_strided_slice %5 {offsets = [0, 0], sizes = [8, 16], strides = [1, 1]} : vector<8x128xf32> to vector<8x16xf32>
    %cst_7 = arith.constant dense<0xFF800000> : vector<8xf32>
    %9 = vector.multi_reduction <maximumf>, %8, %cst_7 [1] : vector<8x16xf32> to vector<8xf32>
    %10 = vector.shape_cast %9 : vector<8xf32> to vector<8x1xf32>
    %11 = vector.broadcast %10 : vector<8x1xf32> to vector<8x16xf32>
    %12 = arith.cmpf oge, %8, %11 : vector<8x16xf32>
    %13 = arith.extui %12 : vector<8x16xi1> to vector<8x16xi32>
    %14 = arith.sitofp %13 : vector<8x16xi32> to vector<8x16xf32>
    %cst_8 = arith.constant dense<0.000000e+00> : vector<8xf32>
    %15 = vector.multi_reduction <add>, %14, %cst_8 [1] : vector<8x16xf32> to vector<8xf32>
    %16 = vector.shape_cast %15 : vector<8xf32> to vector<8x1xf32>
    %cst_9 = arith.constant 0xFF800000 : f32
    %17 = vector.broadcast %cst_9 : f32 to vector<8x16xf32>
    %18 = arith.select %12, %17, %8 : vector<8x16xi1>, vector<8x16xf32>
    %cst_10 = arith.constant dense<0xFF800000> : vector<8xf32>
    %19 = vector.multi_reduction <maximumf>, %18, %cst_10 [1] : vector<8x16xf32> to vector<8xf32>
    %20 = vector.shape_cast %19 : vector<8xf32> to vector<8x1xf32>
    %cst_11 = arith.constant 1.000000e+00 : f32
    %21 = vector.broadcast %cst_11 : f32 to vector<8x1xf32>
    %22 = arith.cmpf ogt, %16, %21 : vector<8x1xf32>
    %23 = arith.select %22, %10, %20 : vector<8x1xi1>, vector<8x1xf32>
    %24 = arith.subf %10, %23 : vector<8x1xf32>
    %25 = vector.broadcast %10 : vector<8x1xf32> to vector<8x16xf32>
    %26 = arith.subf %8, %25 : vector<8x16xf32>
    %cst_12 = arith.constant 1.000000e+00 : f32
    %27 = vector.broadcast %cst_12 : f32 to vector<8x1xf32>
    %28 = arith.divf %27, %24 : vector<8x1xf32>
    %29 = vector.broadcast %28 : vector<8x1xf32> to vector<8x16xf32>
    %30 = arith.mulf %26, %29 : vector<8x16xf32>
    %31 = math.exp %30 : vector<8x16xf32>
    %32 = arith.mulf %31, %31 : vector<8x16xf32>
    %33 = arith.mulf %32, %32 : vector<8x16xf32>
    %34 = arith.mulf %33, %33 : vector<8x16xf32>
    %35 = arith.mulf %34, %32 : vector<8x16xf32>
    %cst_13 = arith.constant dense<0.000000e+00> : vector<8xf32>
    %36 = vector.multi_reduction <add>, %31, %cst_13 [1] : vector<8x16xf32> to vector<8xf32>
    %37 = vector.shape_cast %36 : vector<8xf32> to vector<8x1xf32>
    %38 = tpu.reciprocal %37 {approx = true} : vector<8x1xf32> -> vector<8x1xf32>
    %39 = vector.broadcast %38 : vector<8x1xf32> to vector<8x16xf32>
    %40 = arith.mulf %31, %39 : vector<8x16xf32>
    %41 = arith.addf %6, %40 : vector<8x16xf32>
    %cst_14 = arith.constant dense<0.000000e+00> : vector<8xf32>
    %42 = vector.multi_reduction <add>, %35, %cst_14 [1] : vector<8x16xf32> to vector<8xf32>
    %43 = vector.shape_cast %42 : vector<8xf32> to vector<8x1xf32>
    %44 = tpu.reciprocal %43 {approx = true} : vector<8x1xf32> -> vector<8x1xf32>
    %45 = vector.broadcast %44 : vector<8x1xf32> to vector<8x16xf32>
    %46 = arith.mulf %35, %45 : vector<8x16xf32>
    %47 = arith.addf %7, %46 : vector<8x16xf32>
    %48 = vector.extract_strided_slice %5 {offsets = [0, 16], sizes = [8, 16], strides = [1, 1]} : vector<8x128xf32> to vector<8x16xf32>
    %cst_15 = arith.constant dense<0xFF800000> : vector<8xf32>
    %49 = vector.multi_reduction <maximumf>, %48, %cst_15 [1] : vector<8x16xf32> to vector<8xf32>
    %50 = vector.shape_cast %49 : vector<8xf32> to vector<8x1xf32>
    %51 = vector.broadcast %50 : vector<8x1xf32> to vector<8x16xf32>
    %52 = arith.cmpf oge, %48, %51 : vector<8x16xf32>
    %53 = arith.extui %52 : vector<8x16xi1> to vector<8x16xi32>
    %54 = arith.sitofp %53 : vector<8x16xi32> to vector<8x16xf32>
    %cst_16 = arith.constant dense<0.000000e+00> : vector<8xf32>
    %55 = vector.multi_reduction <add>, %54, %cst_16 [1] : vector<8x16xf32> to vector<8xf32>
    %56 = vector.shape_cast %55 : vector<8xf32> to vector<8x1xf32>
    %cst_17 = arith.constant 0xFF800000 : f32
    %57 = vector.broadcast %cst_17 : f32 to vector<8x16xf32>
    %58 = arith.select %52, %57, %48 : vector<8x16xi1>, vector<8x16xf32>
    %cst_18 = arith.constant dense<0xFF800000> : vector<8xf32>
    %59 = vector.multi_reduction <maximumf>, %58, %cst_18 [1] : vector<8x16xf32> to vector<8xf32>
    %60 = vector.shape_cast %59 : vector<8xf32> to vector<8x1xf32>
    %cst_19 = arith.constant 1.000000e+00 : f32
    %61 = vector.broadcast %cst_19 : f32 to vector<8x1xf32>
    %62 = arith.cmpf ogt, %56, %61 : vector<8x1xf32>
    %63 = arith.select %62, %50, %60 : vector<8x1xi1>, vector<8x1xf32>
    %64 = arith.subf %50, %63 : vector<8x1xf32>
    %65 = vector.broadcast %50 : vector<8x1xf32> to vector<8x16xf32>
    %66 = arith.subf %48, %65 : vector<8x16xf32>
    %cst_20 = arith.constant 1.000000e+00 : f32
    %67 = vector.broadcast %cst_20 : f32 to vector<8x1xf32>
    %68 = arith.divf %67, %64 : vector<8x1xf32>
    %69 = vector.broadcast %68 : vector<8x1xf32> to vector<8x16xf32>
    %70 = arith.mulf %66, %69 : vector<8x16xf32>
    %71 = math.exp %70 : vector<8x16xf32>
    %72 = arith.mulf %71, %71 : vector<8x16xf32>
    %73 = arith.mulf %72, %72 : vector<8x16xf32>
    %74 = arith.mulf %73, %73 : vector<8x16xf32>
    %75 = arith.mulf %74, %72 : vector<8x16xf32>
    %cst_21 = arith.constant dense<0.000000e+00> : vector<8xf32>
    %76 = vector.multi_reduction <add>, %71, %cst_21 [1] : vector<8x16xf32> to vector<8xf32>
    %77 = vector.shape_cast %76 : vector<8xf32> to vector<8x1xf32>
    %78 = tpu.reciprocal %77 {approx = true} : vector<8x1xf32> -> vector<8x1xf32>
    %79 = vector.broadcast %78 : vector<8x1xf32> to vector<8x16xf32>
    %80 = arith.mulf %71, %79 : vector<8x16xf32>
    %81 = arith.addf %41, %80 : vector<8x16xf32>
    %cst_22 = arith.constant dense<0.000000e+00> : vector<8xf32>
    %82 = vector.multi_reduction <add>, %75, %cst_22 [1] : vector<8x16xf32> to vector<8xf32>
    %83 = vector.shape_cast %82 : vector<8xf32> to vector<8x1xf32>
    %84 = tpu.reciprocal %83 {approx = true} : vector<8x1xf32> -> vector<8x1xf32>
    %85 = vector.broadcast %84 : vector<8x1xf32> to vector<8x16xf32>
    %86 = arith.mulf %75, %85 : vector<8x16xf32>
    %87 = arith.addf %47, %86 : vector<8x16xf32>
    %88 = vector.extract_strided_slice %5 {offsets = [0, 32], sizes = [8, 16], strides = [1, 1]} : vector<8x128xf32> to vector<8x16xf32>
    %cst_23 = arith.constant dense<0xFF800000> : vector<8xf32>
    %89 = vector.multi_reduction <maximumf>, %88, %cst_23 [1] : vector<8x16xf32> to vector<8xf32>
    %90 = vector.shape_cast %89 : vector<8xf32> to vector<8x1xf32>
    %91 = vector.broadcast %90 : vector<8x1xf32> to vector<8x16xf32>
    %92 = arith.cmpf oge, %88, %91 : vector<8x16xf32>
    %93 = arith.extui %92 : vector<8x16xi1> to vector<8x16xi32>
    %94 = arith.sitofp %93 : vector<8x16xi32> to vector<8x16xf32>
    %cst_24 = arith.constant dense<0.000000e+00> : vector<8xf32>
    %95 = vector.multi_reduction <add>, %94, %cst_24 [1] : vector<8x16xf32> to vector<8xf32>
    %96 = vector.shape_cast %95 : vector<8xf32> to vector<8x1xf32>
    %cst_25 = arith.constant 0xFF800000 : f32
    %97 = vector.broadcast %cst_25 : f32 to vector<8x16xf32>
    %98 = arith.select %92, %97, %88 : vector<8x16xi1>, vector<8x16xf32>
    %cst_26 = arith.constant dense<0xFF800000> : vector<8xf32>
    %99 = vector.multi_reduction <maximumf>, %98, %cst_26 [1] : vector<8x16xf32> to vector<8xf32>
    %100 = vector.shape_cast %99 : vector<8xf32> to vector<8x1xf32>
    %cst_27 = arith.constant 1.000000e+00 : f32
    %101 = vector.broadcast %cst_27 : f32 to vector<8x1xf32>
    %102 = arith.cmpf ogt, %96, %101 : vector<8x1xf32>
    %103 = arith.select %102, %90, %100 : vector<8x1xi1>, vector<8x1xf32>
    %104 = arith.subf %90, %103 : vector<8x1xf32>
    %105 = vector.broadcast %90 : vector<8x1xf32> to vector<8x16xf32>
    %106 = arith.subf %88, %105 : vector<8x16xf32>
    %cst_28 = arith.constant 1.000000e+00 : f32
    %107 = vector.broadcast %cst_28 : f32 to vector<8x1xf32>
    %108 = arith.divf %107, %104 : vector<8x1xf32>
    %109 = vector.broadcast %108 : vector<8x1xf32> to vector<8x16xf32>
    %110 = arith.mulf %106, %109 : vector<8x16xf32>
    %111 = math.exp %110 : vector<8x16xf32>
    %112 = arith.mulf %111, %111 : vector<8x16xf32>
    %113 = arith.mulf %112, %112 : vector<8x16xf32>
    %114 = arith.mulf %113, %113 : vector<8x16xf32>
    %115 = arith.mulf %114, %112 : vector<8x16xf32>
    %cst_29 = arith.constant dense<0.000000e+00> : vector<8xf32>
    %116 = vector.multi_reduction <add>, %111, %cst_29 [1] : vector<8x16xf32> to vector<8xf32>
    %117 = vector.shape_cast %116 : vector<8xf32> to vector<8x1xf32>
    %118 = tpu.reciprocal %117 {approx = true} : vector<8x1xf32> -> vector<8x1xf32>
    %119 = vector.broadcast %118 : vector<8x1xf32> to vector<8x16xf32>
    %120 = arith.mulf %111, %119 : vector<8x16xf32>
    %121 = arith.addf %81, %120 : vector<8x16xf32>
    %cst_30 = arith.constant dense<0.000000e+00> : vector<8xf32>
    %122 = vector.multi_reduction <add>, %115, %cst_30 [1] : vector<8x16xf32> to vector<8xf32>
    %123 = vector.shape_cast %122 : vector<8xf32> to vector<8x1xf32>
    %124 = tpu.reciprocal %123 {approx = true} : vector<8x1xf32> -> vector<8x1xf32>
    %125 = vector.broadcast %124 : vector<8x1xf32> to vector<8x16xf32>
    %126 = arith.mulf %115, %125 : vector<8x16xf32>
    %127 = arith.addf %87, %126 : vector<8x16xf32>
    %cst_31 = arith.constant 0.333333343 : f32
    %128 = vector.broadcast %cst_31 : f32 to vector<8x16xf32>
    %129 = arith.mulf %121, %128 : vector<8x16xf32>
    %cst_32 = arith.constant 0.000000e+00 : f32
    %130 = vector.broadcast %cst_32 : f32 to vector<8x16xf32>
    %131 = arith.maximumf %129, %130 : vector<8x16xf32>
    %132 = math.log %131 : vector<8x16xf32>
    %cst_33 = arith.constant 0.333333343 : f32
    %133 = vector.broadcast %cst_33 : f32 to vector<8x16xf32>
    %134 = arith.mulf %127, %133 : vector<8x16xf32>
    %cst_34 = arith.constant 0.000000e+00 : f32
    %135 = vector.broadcast %cst_34 : f32 to vector<8x16xf32>
    %136 = arith.maximumf %134, %135 : vector<8x16xf32>
    %137 = math.log %136 : vector<8x16xf32>
    %138 = vector.extract_strided_slice %5 {offsets = [0, 0], sizes = [8, 48], strides = [1, 1]} : vector<8x128xf32> to vector<8x48xf32>
    %cst_35 = arith.constant 0.000000e+00 : f32
    %139 = vector.broadcast %cst_35 : f32 to vector<8x48xf32>
    %140 = tpu.concatenate %138, %132, %137, %139 in 1 : vector<8x48xf32>, vector<8x16xf32>, vector<8x16xf32>, vector<8x48xf32> -> vector<8x128xf32>
    %c0_36 = arith.constant 0 : index
    %c0_37 = arith.constant 0 : index
    %141 = vector.load %arg3[%c0_36, %c0_37] : memref<8x128xf32, #tpu.memory_space<vmem>>, vector<8x128xf32>
    tpu.vector_store %arg3[%c0_36, %c0_37], %140 {strides = array<i32>} : memref<8x128xf32, #tpu.memory_space<vmem>>, vector<8x128xf32>,
    return
  }
}

</mosaic_0001>

<llo_original>
// kernel: ensemble_forward.1
$region0: #{ensemble_forward.1}
  #allocation0 [shape = 'u32[]', space=smem, size = 0x4, offset = 0x4, fixed_abs, tag = 'smem constant byte address 0x4 - core index']
  #allocation1 [shape = 'u32[144,128]{1,0:T(1,128)}', space=vmem, size = 0x12000, scoped, tag = 'internal scratch']
  %s0 = inlined_call_operand.vmem [shape: bf16[8,1024], index: 0, kind: input, shape index: {}]
  %s1 = inlined_call_operand.hbm [shape: bf16[1024,128], index: 1, kind: input, shape index: {}]
  %s2 = inlined_call_operand.vmem [shape: f32[1,128], index: 2, kind: input, shape index: {}]
  %s3 = inlined_call_operand.vmem [shape: f32[8,128], index: 3, kind: output, shape index: {}]
  %s4 = sld [smem:[#allocation0]]
  $region26: #{ensemble_forward.1} parent=0
    _
  %s6 = ssub.s32 1, %s4
  %s7 = scalar_select 0, %s6, %s4
  $region1: #{ensemble_forward.1} parent=0
    #allocation2 [shape = 'u8[262144]{0}', space=vmem, size = 0x40000, scoped, tag = 'input window, operand 1, single buffered']
    #allocation3 [shape = 's32[1]{0}', space=sflag, size = 0x4, scoped, tag = 'scoped memory for ensemble_forward.1']
    %8 = vsyncpa [#allocation3], 0
    // Predicated region
    $region2: #{ensemble_forward.1} parent=1 // pred_check
      _
    $region3: #{ensemble_forward.1} parent=1 // pred_check_branch
      %10 = sbr.rel (0) target = $region5
    $region4: #{ensemble_forward.1} parent=1 // pred_region
      _
    $region5: #{ensemble_forward.1} parent=1 // pred_fallthru
      _
    // Predicated region
    $region6: #{ensemble_forward.1} parent=1 // pred_check
      _
    $region7: #{ensemble_forward.1} parent=1 // pred_check_branch
      %12 = sbr.rel (0) target = $region9
    $region8: #{ensemble_forward.1} parent=1 // pred_region
      %s14 = ssub.s32 8192, 8192
      %15 = vsyncadd [#allocation3], %s14
      %s16 = sshll.u32 [#allocation2], 4
      %s17 = int_to_ptr.vmem [resolvable:$true] %s16
      %22 = dma.hbm_to_vmem [thread:$0]  %s1, 8192, %s17, [#allocation3], 64, 64, 4
    $region9: #{ensemble_forward.1} parent=1 // pred_fallthru
      _
    // Predicated region
    $region10: #{ensemble_forward.1} parent=1 // pred_check
      _
    $region11: #{ensemble_forward.1} parent=1 // pred_check_branch
      %24 = sbr.rel (0) target = $region13
    $region12: #{ensemble_forward.1} parent=1 // pred_region
      _
    $region13: #{ensemble_forward.1} parent=1 // pred_fallthru
      _
    // Predicated region
    $region14: #{ensemble_forward.1} parent=1 // pred_check
      _
    $region15: #{ensemble_forward.1} parent=1 // pred_check_branch
      %26 = sbr.rel (0) target = $region17
    $region16: #{ensemble_forward.1} parent=1 // pred_region
      %27 = dma.done [#allocation3], 8192
    $region17: #{ensemble_forward.1} parent=1 // pred_fallthru
      _
    %v29 = vld [vmem:[%s0] sm:$0xff]
    %v30 = vld [vmem:[%s0 + $0x8] sm:$0xff]
    %v31 = vld [vmem:[%s0 + $0x10] sm:$0xff]
    %v32 = vld [vmem:[%s0 + $0x18] sm:$0xff]
    %v33 = vld [vmem:[#allocation2] sm:$0xf]
    %v34 = vld [vmem:[#allocation2 + $0x4] sm:$0xf]
    %v35 = vld [vmem:[#allocation2 + $0x8] sm:$0xf]
    %v36 = vld [vmem:[#allocation2 + $0xc] sm:$0xf]
    %v37 = vld [vmem:[#allocation2 + $0x10] sm:$0xf]
    %v38 = vld [vmem:[#allocation2 + $0x14] sm:$0xf]
    %v39 = vld [vmem:[#allocation2 + $0x18] sm:$0xf]
    %v40 = vld [vmem:[#allocation2 + $0x1c] sm:$0xf]
    %v41 = vld [vmem:[#allocation2 + $0x20] sm:$0xf]
    %v42 = vld [vmem:[#allocation2 + $0x24] sm:$0xf]
    %v43 = vld [vmem:[#allocation2 + $0x28] sm:$0xf]
    %v44 = vld [vmem:[#allocation2 + $0x2c] sm:$0xf]
    %v45 = vld [vmem:[#allocation2 + $0x30] sm:$0xf]
    %v46 = vld [vmem:[#allocation2 + $0x34] sm:$0xf]
    %v47 = vld [vmem:[#allocation2 + $0x38] sm:$0xf]
    %v48 = vld [vmem:[#allocation2 + $0x3c] sm:$0xf]
    %v49 = vld [vmem:[#allocation2 + $0x40] sm:$0xf]
    %v50 = vld [vmem:[#allocation2 + $0x44] sm:$0xf]
    %v51 = vld [vmem:[#allocation2 + $0x48] sm:$0xf]
    %v52 = vld [vmem:[#allocation2 + $0x4c] sm:$0xf]
    %v53 = vld [vmem:[#allocation2 + $0x50] sm:$0xf]
    %v54 = vld [vmem:[#allocation2 + $0x54] sm:$0xf]
    %v55 = vld [vmem:[#allocation2 + $0x58] sm:$0xf]
    %v56 = vld [vmem:[#allocation2 + $0x5c] sm:$0xf]
    %v57 = vld [vmem:[#allocation2 + $0x60] sm:$0xf]
    %v58 = vld [vmem:[#allocation2 + $0x64] sm:$0xf]
    %v59 = vld [vmem:[#allocation2 + $0x68] sm:$0xf]
    %v60 = vld [vmem:[#allocation2 + $0x6c] sm:$0xf]
    %v61 = vld [vmem:[#allocation2 + $0x70] sm:$0xf]
    %v62 = vld [vmem:[#allocation2 + $0x74] sm:$0xf]
    %v63 = vld [vmem:[#allocation2 + $0x78] sm:$0xf]
    %v64 = vld [vmem:[#allocation2 + $0x7c] sm:$0xf]
    %v65 = vld [vmem:[#allocation2 + $0x80] sm:$0xf]
    %v66 = vld [vmem:[#allocation2 + $0x84] sm:$0xf]
    %v67 = vld [vmem:[#allocation2 + $0x88] sm:$0xf]
    %v68 = vld [vmem:[#allocation2 + $0x8c] sm:$0xf]
    %v69 = vld [vmem:[#allocation2 + $0x90] sm:$0xf]
    %v70 = vld [vmem:[#allocation2 + $0x94] sm:$0xf]
    %v71 = vld [vmem:[#allocation2 + $0x98] sm:$0xf]
    %v72 = vld [vmem:[#allocation2 + $0x9c] sm:$0xf]
    %v73 = vld [vmem:[#allocation2 + $0xa0] sm:$0xf]
    %v74 = vld [vmem:[#allocation2 + $0xa4] sm:$0xf]
    %v75 = vld [vmem:[#allocation2 + $0xa8] sm:$0xf]
    %v76 = vld [vmem:[#allocation2 + $0xac] sm:$0xf]
    %v77 = vld [vmem:[#allocation2 + $0xb0] sm:$0xf]
    %v78 = vld [vmem:[#allocation2 + $0xb4] sm:$0xf]
    %v79 = vld [vmem:[#allocation2 + $0xb8] sm:$0xf]
    %v80 = vld [vmem:[#allocation2 + $0xbc] sm:$0xf]
    %v81 = vld [vmem:[#allocation2 + $0xc0] sm:$0xf]
    %v82 = vld [vmem:[#allocation2 + $0xc4] sm:$0xf]
    %v83 = vld [vmem:[#allocation2 + $0xc8] sm:$0xf]
    %v84 = vld [vmem:[#allocation2 + $0xcc] sm:$0xf]
    %v85 = vld [vmem:[#allocation2 + $0xd0] sm:$0xf]
    %v86 = vld [vmem:[#allocation2 + $0xd4] sm:$0xf]
    %v87 = vld [vmem:[#allocation2 + $0xd8] sm:$0xf]
    %v88 = vld [vmem:[#allocation2 + $0xdc] sm:$0xf]
    %v89 = vld [vmem:[#allocation2 + $0xe0] sm:$0xf]
    %v90 = vld [vmem:[#allocation2 + $0xe4] sm:$0xf]
    %v91 = vld [vmem:[#allocation2 + $0xe8] sm:$0xf]
    %v92 = vld [vmem:[#allocation2 + $0xec] sm:$0xf]
    %v93 = vld [vmem:[#allocation2 + $0xf0] sm:$0xf]
    %v94 = vld [vmem:[#allocation2 + $0xf4] sm:$0xf]
    %v95 = vld [vmem:[#allocation2 + $0xf8] sm:$0xf]
    %v96 = vld [vmem:[#allocation2 + $0xfc] sm:$0xf]
    %v97 = vld [vmem:[#allocation2 + $0x100] sm:$0xf]
    %v98 = vld [vmem:[#allocation2 + $0x104] sm:$0xf]
    %v99 = vld [vmem:[#allocation2 + $0x108] sm:$0xf]
    %v100 = vld [vmem:[#allocation2 + $0x10c] sm:$0xf]
    %v101 = vld [vmem:[#allocation2 + $0x110] sm:$0xf]
    %v102 = vld [vmem:[#allocation2 + $0x114] sm:$0xf]
    %v103 = vld [vmem:[#allocation2 + $0x118] sm:$0xf]
    %v104 = vld [vmem:[#allocation2 + $0x11c] sm:$0xf]
    %v105 = vld [vmem:[#allocation2 + $0x120] sm:$0xf]
    %v106 = vld [vmem:[#allocation2 + $0x124] sm:$0xf]
    %v107 = vld [vmem:[#allocation2 + $0x128] sm:$0xf]
    %v108 = vld [vmem:[#allocation2 + $0x12c] sm:$0xf]
    %v109 = vld [vmem:[#allocation2 + $0x130] sm:$0xf]
    %v110 = vld [vmem:[#allocation2 + $0x134] sm:$0xf]
    %v111 = vld [vmem:[#allocation2 + $0x138] sm:$0xf]
    %v112 = vld [vmem:[#allocation2 + $0x13c] sm:$0xf]
    %v113 = vld [vmem:[#allocation2 + $0x140] sm:$0xf]
    %v114 = vld [vmem:[#allocation2 + $0x144] sm:$0xf]
    %v115 = vld [vmem:[#allocation2 + $0x148] sm:$0xf]
    %v116 = vld [vmem:[#allocation2 + $0x14c] sm:$0xf]
    %v117 = vld [vmem:[#allocation2 + $0x150] sm:$0xf]
    %v118 = vld [vmem:[#allocation2 + $0x154] sm:$0xf]
    %v119 = vld [vmem:[#allocation2 + $0x158] sm:$0xf]
    %v120 = vld [vmem:[#allocation2 + $0x15c] sm:$0xf]
    %v121 = vld [vmem:[#allocation2 + $0x160] sm:$0xf]
    %v122 = vld [vmem:[#allocation2 + $0x164] sm:$0xf]
    %v123 = vld [vmem:[#allocation2 + $0x168] sm:$0xf]
    %v124 = vld [vmem:[#allocation2 + $0x16c] sm:$0xf]
    %v125 = vld [vmem:[#allocation2 + $0x170] sm:$0xf]
    %v126 = vld [vmem:[#allocation2 + $0x174] sm:$0xf]
    %v127 = vld [vmem:[#allocation2 + $0x178] sm:$0xf]
    %v128 = vld [vmem:[#allocation2 + $0x17c] sm:$0xf]
    %v129 = vld [vmem:[#allocation2 + $0x180] sm:$0xf]
    %v130 = vld [vmem:[#allocation2 + $0x184] sm:$0xf]
    %v131 = vld [vmem:[#allocation2 + $0x188] sm:$0xf]
    %v132 = vld [vmem:[#allocation2 + $0x18c] sm:$0xf]
    %v133 = vld [vmem:[#allocation2 + $0x190] sm:$0xf]
    %v134 = vld [vmem:[#allocation2 + $0x194] sm:$0xf]
    %v135 = vld [vmem:[#allocation2 + $0x198] sm:$0xf]
    %v136 = vld [vmem:[#allocation2 + $0x19c] sm:$0xf]
    %v137 = vld [vmem:[#allocation2 + $0x1a0] sm:$0xf]
    %v138 = vld [vmem:[#allocation2 + $0x1a4] sm:$0xf]
    %v139 = vld [vmem:[#allocation2 + $0x1a8] sm:$0xf]
    %v140 = vld [vmem:[#allocation2 + $0x1ac] sm:$0xf]
    %v141 = vld [vmem:[#allocation2 + $0x1b0] sm:$0xf]
    %v142 = vld [vmem:[#allocation2 + $0x1b4] sm:$0xf]
    %v143 = vld [vmem:[#allocation2 + $0x1b8] sm:$0xf]
    %v144 = vld [vmem:[#allocation2 + $0x1bc] sm:$0xf]
    %v145 = vld [vmem:[#allocation2 + $0x1c0] sm:$0xf]
    %v146 = vld [vmem:[#allocation2 + $0x1c4] sm:$0xf]
    %v147 = vld [vmem:[#allocation2 + $0x1c8] sm:$0xf]
    %v148 = vld [vmem:[#allocation2 + $0x1cc] sm:$0xf]
    %v149 = vld [vmem:[#allocation2 + $0x1d0] sm:$0xf]
    %v150 = vld [vmem:[#allocation2 + $0x1d4] sm:$0xf]
    %v151 = vld [vmem:[#allocation2 + $0x1d8] sm:$0xf]
    %v152 = vld [vmem:[#allocation2 + $0x1dc] sm:$0xf]
    %v153 = vld [vmem:[#allocation2 + $0x1e0] sm:$0xf]
    %v154 = vld [vmem:[#allocation2 + $0x1e4] sm:$0xf]
    %v155 = vld [vmem:[#allocation2 + $0x1e8] sm:$0xf]
    %v156 = vld [vmem:[#allocation2 + $0x1ec] sm:$0xf]
    %v157 = vld [vmem:[#allocation2 + $0x1f0] sm:$0xf]
    %v158 = vld [vmem:[#allocation2 + $0x1f4] sm:$0xf]
    %v159 = vld [vmem:[#allocation2 + $0x1f8] sm:$0xf]
    %v160 = vld [vmem:[#allocation2 + $0x1fc] sm:$0xf]
    %v161 = vld [vmem:[%s2] sm:$0x1]
    %v163 = vlaneseq
    %v164 = vshrl.u32 %v163, 7
    %v165 = vsub.s32 0, %v164
    %v166 = vrot.slane %v161, %v165
    %v172 = vunpack.c.l.b16 %v29
    %v173 = vunpack.c.h.b16 %v29
    %v174 = vunpack.c.l.b16 %v30
    %v175 = vunpack.c.h.b16 %v30
    %v176 = vunpack.c.l.b16 %v31
    %v177 = vunpack.c.h.b16 %v31
    %v178 = vunpack.c.l.b16 %v32
    %v179 = vunpack.c.h.b16 %v32
    %v180 = vpack.c.b16 %v172, %v172
    %v181 = vpack.c.b16 %v173, %v173
    %v182 = vpack.c.b16 %v174, %v174
    %v183 = vpack.c.b16 %v175, %v175
    %v184 = vpack.c.b16 %v176, %v176
    %v185 = vpack.c.b16 %v177, %v177
    %v186 = vpack.c.b16 %v178, %v178
    %v187 = vpack.c.b16 %v179, %v179
    %v324 = vunpack.c.l.b16 %v33
    %v325 = vunpack.c.l.b16 %v34
    %v326 = vunpack.c.l.b16 %v35
    %v327 = vunpack.c.l.b16 %v36
    %v328 = vunpack.c.l.b16 %v37
    %v329 = vunpack.c.l.b16 %v38
    %v330 = vunpack.c.l.b16 %v39
    %v331 = vunpack.c.l.b16 %v40
    %v332 = vunpack.c.l.b16 %v41
    %v333 = vunpack.c.l.b16 %v42
    %v334 = vunpack.c.l.b16 %v43
    %v335 = vunpack.c.l.b16 %v44
    %v336 = vunpack.c.l.b16 %v45
    %v337 = vunpack.c.l.b16 %v46
    %v338 = vunpack.c.l.b16 %v47
    %v339 = vunpack.c.l.b16 %v48
    %v340 = vunpack.c.l.b16 %v49
    %v341 = vunpack.c.l.b16 %v50
    %v342 = vunpack.c.l.b16 %v51
    %v343 = vunpack.c.l.b16 %v52
    %v344 = vunpack.c.l.b16 %v53
    %v345 = vunpack.c.l.b16 %v54
    %v346 = vunpack.c.l.b16 %v55
    %v347 = vunpack.c.l.b16 %v56
    %v348 = vunpack.c.l.b16 %v57
    %v349 = vunpack.c.l.b16 %v58
    %v350 = vunpack.c.l.b16 %v59
    %v351 = vunpack.c.l.b16 %v60
    %v352 = vunpack.c.l.b16 %v61
    %v353 = vunpack.c.l.b16 %v62
    %v354 = vunpack.c.l.b16 %v63
    %v355 = vunpack.c.l.b16 %v64
    %v356 = vunpack.c.l.b16 %v65
    %v357 = vunpack.c.l.b16 %v66
    %v358 = vunpack.c.l.b16 %v67
    %v359 = vunpack.c.l.b16 %v68
    %v360 = vunpack.c.l.b16 %v69
    %v361 = vunpack.c.l.b16 %v70
    %v362 = vunpack.c.l.b16 %v71
    %v363 = vunpack.c.l.b16 %v72
    %v364 = vunpack.c.l.b16 %v73
    %v365 = vunpack.c.l.b16 %v74
    %v366 = vunpack.c.l.b16 %v75
    %v367 = vunpack.c.l.b16 %v76
    %v368 = vunpack.c.l.b16 %v77
    %v369 = vunpack.c.l.b16 %v78
    %v370 = vunpack.c.l.b16 %v79
    %v371 = vunpack.c.l.b16 %v80
    %v372 = vunpack.c.l.b16 %v81
    %v373 = vunpack.c.l.b16 %v82
    %v374 = vunpack.c.l.b16 %v83
    %v375 = vunpack.c.l.b16 %v84
    %v376 = vunpack.c.l.b16 %v85
    %v377 = vunpack.c.l.b16 %v86
    %v378 = vunpack.c.l.b16 %v87
    %v379 = vunpack.c.l.b16 %v88
    %v380 = vunpack.c.l.b16 %v89
    %v381 = vunpack.c.l.b16 %v90
    %v382 = vunpack.c.l.b16 %v91
    %v383 = vunpack.c.l.b16 %v92
    %v384 = vunpack.c.l.b16 %v93
    %v385 = vunpack.c.l.b16 %v94
    %v386 = vunpack.c.l.b16 %v95
    %v387 = vunpack.c.l.b16 %v96
    %v388 = vunpack.c.l.b16 %v97
    %v389 = vunpack.c.l.b16 %v98
    %v390 = vunpack.c.l.b16 %v99
    %v391 = vunpack.c.l.b16 %v100
    %v392 = vunpack.c.l.b16 %v101
    %v393 = vunpack.c.l.b16 %v102
    %v394 = vunpack.c.l.b16 %v103
    %v395 = vunpack.c.l.b16 %v104
    %v396 = vunpack.c.l.b16 %v105
    %v397 = vunpack.c.l.b16 %v106
    %v398 = vunpack.c.l.b16 %v107
    %v399 = vunpack.c.l.b16 %v108
    %v400 = vunpack.c.l.b16 %v109
    %v401 = vunpack.c.l.b16 %v110
    %v402 = vunpack.c.l.b16 %v111
    %v403 = vunpack.c.l.b16 %v112
    %v404 = vunpack.c.l.b16 %v113
    %v405 = vunpack.c.l.b16 %v114
    %v406 = vunpack.c.l.b16 %v115
    %v407 = vunpack.c.l.b16 %v116
    %v408 = vunpack.c.l.b16 %v117
    %v409 = vunpack.c.l.b16 %v118
    %v410 = vunpack.c.l.b16 %v119
    %v411 = vunpack.c.l.b16 %v120
    %v412 = vunpack.c.l.b16 %v121
    %v413 = vunpack.c.l.b16 %v122
    %v414 = vunpack.c.l.b16 %v123
    %v415 = vunpack.c.l.b16 %v124
    %v416 = vunpack.c.l.b16 %v125
    %v417 = vunpack.c.l.b16 %v126
    %v418 = vunpack.c.l.b16 %v127
    %v419 = vunpack.c.l.b16 %v128
    %v420 = vunpack.c.l.b16 %v129
    %v421 = vunpack.c.l.b16 %v130
    %v422 = vunpack.c.l.b16 %v131
    %v423 = vunpack.c.l.b16 %v132
    %v424 = vunpack.c.l.b16 %v133
    %v425 = vunpack.c.l.b16 %v134
    %v426 = vunpack.c.l.b16 %v135
    %v427 = vunpack.c.l.b16 %v136
    %v428 = vunpack.c.l.b16 %v137
    %v429 = vunpack.c.l.b16 %v138
    %v430 = vunpack.c.l.b16 %v139
    %v431 = vunpack.c.l.b16 %v140
    %v432 = vunpack.c.l.b16 %v141
    %v433 = vunpack.c.l.b16 %v142
    %v434 = vunpack.c.l.b16 %v143
    %v435 = vunpack.c.l.b16 %v144
    %v436 = vunpack.c.l.b16 %v145
    %v437 = vunpack.c.l.b16 %v146
    %v438 = vunpack.c.l.b16 %v147
    %v439 = vunpack.c.l.b16 %v148
    %v440 = vunpack.c.l.b16 %v149
    %v441 = vunpack.c.l.b16 %v150
    %v442 = vunpack.c.l.b16 %v151
    %v443 = vunpack.c.l.b16 %v152
    %v444 = vunpack.c.l.b16 %v153
    %v445 = vunpack.c.l.b16 %v154
    %v446 = vunpack.c.l.b16 %v155
    %v447 = vunpack.c.l.b16 %v156
    %v448 = vunpack.c.l.b16 %v157
    %v449 = vunpack.c.l.b16 %v158
    %v450 = vunpack.c.l.b16 %v159
    %v451 = vunpack.c.l.b16 %v160
    %v452 = vpack.c.b16 %v325, %v324
    %v453 = vpack.c.b16 %v327, %v326
    %v454 = vpack.c.b16 %v329, %v328
    %v455 = vpack.c.b16 %v331, %v330
    %v456 = vpack.c.b16 %v333, %v332
    %v457 = vpack.c.b16 %v335, %v334
    %v458 = vpack.c.b16 %v337, %v336
    %v459 = vpack.c.b16 %v339, %v338
    %v460 = vpack.c.b16 %v341, %v340
    %v461 = vpack.c.b16 %v343, %v342
    %v462 = vpack.c.b16 %v345, %v344
    %v463 = vpack.c.b16 %v347, %v346
    %v464 = vpack.c.b16 %v349, %v348
    %v465 = vpack.c.b16 %v351, %v350
    %v466 = vpack.c.b16 %v353, %v352
    %v467 = vpack.c.b16 %v355, %v354
    %v468 = vpack.c.b16 %v357, %v356
    %v469 = vpack.c.b16 %v359, %v358
    %v470 = vpack.c.b16 %v361, %v360
    %v471 = vpack.c.b16 %v363, %v362
    %v472 = vpack.c.b16 %v365, %v364
    %v473 = vpack.c.b16 %v367, %v366
    %v474 = vpack.c.b16 %v369, %v368
    %v475 = vpack.c.b16 %v371, %v370
    %v476 = vpack.c.b16 %v373, %v372
    %v477 = vpack.c.b16 %v375, %v374
    %v478 = vpack.c.b16 %v377, %v376
    %v479 = vpack.c.b16 %v379, %v378
    %v480 = vpack.c.b16 %v381, %v380
    %v481 = vpack.c.b16 %v383, %v382
    %v482 = vpack.c.b16 %v385, %v384
    %v483 = vpack.c.b16 %v387, %v386
    %v484 = vpack.c.b16 %v389, %v388
    %v485 = vpack.c.b16 %v391, %v390
    %v486 = vpack.c.b16 %v393, %v392
    %v487 = vpack.c.b16 %v395, %v394
    %v488 = vpack.c.b16 %v397, %v396
    %v489 = vpack.c.b16 %v399, %v398
    %v490 = vpack.c.b16 %v401, %v400
    %v491 = vpack.c.b16 %v403, %v402
    %v492 = vpack.c.b16 %v405, %v404
    %v493 = vpack.c.b16 %v407, %v406
    %v494 = vpack.c.b16 %v409, %v408
    %v495 = vpack.c.b16 %v411, %v410
    %v496 = vpack.c.b16 %v413, %v412
    %v497 = vpack.c.b16 %v415, %v414
    %v498 = vpack.c.b16 %v417, %v416
    %v499 = vpack.c.b16 %v419, %v418
    %v500 = vpack.c.b16 %v421, %v420
    %v501 = vpack.c.b16 %v423, %v422
    %v502 = vpack.c.b16 %v425, %v424
    %v503 = vpack.c.b16 %v427, %v426
    %v504 = vpack.c.b16 %v429, %v428
    %v505 = vpack.c.b16 %v431, %v430
    %v506 = vpack.c.b16 %v433, %v432
    %v507 = vpack.c.b16 %v435, %v434
    %v508 = vpack.c.b16 %v437, %v436
    %v509 = vpack.c.b16 %v439, %v438
    %v510 = vpack.c.b16 %v441, %v440
    %v511 = vpack.c.b16 %v443, %v442
    %v512 = vpack.c.b16 %v445, %v444
    %v513 = vpack.c.b16 %v447, %v446
    %v514 = vpack.c.b16 %v449, %v448
    %v515 = vpack.c.b16 %v451, %v450
    %580 = vmatprep.subr.bf16.mxu0 0
    %581 = vmatpush1.bf16.msra.mxu0 %v452
    %582 = vmatprep.subr.bf16.mxu0 0
    %583 = vmatpush1.bf16.msra.mxu0 %v453
    %584 = vmatprep.subr.bf16.mxu0 0
    %585 = vmatpush1.bf16.msra.mxu0 %v454
    %586 = vmatprep.subr.bf16.mxu0 0
    %587 = vmatpush1.bf16.msra.mxu0 %v455
    %588 = vmatprep.subr.bf16.mxu0 0
    %589 = vmatpush1.bf16.msra.mxu0 %v456
    %590 = vmatprep.subr.bf16.mxu0 0
    %591 = vmatpush1.bf16.msra.mxu0 %v457
    %592 = vmatprep.subr.bf16.mxu0 0
    %593 = vmatpush1.bf16.msra.mxu0 %v458
    %594 = vmatprep.subr.bf16.mxu0 0
    %595 = vmatpush1.bf16.msra.mxu0 %v459
    %596 = vmatprep.subr.bf16.mxu0 0
    %597 = vmatpush1.bf16.msra.mxu0 %v460
    %598 = vmatprep.subr.bf16.mxu0 0
    %599 = vmatpush1.bf16.msra.mxu0 %v461
    %600 = vmatprep.subr.bf16.mxu0 0
    %601 = vmatpush1.bf16.msra.mxu0 %v462
    %602 = vmatprep.subr.bf16.mxu0 0
    %603 = vmatpush1.bf16.msra.mxu0 %v463
    %604 = vmatprep.subr.bf16.mxu0 0
    %605 = vmatpush1.bf16.msra.mxu0 %v464
    %606 = vmatprep.subr.bf16.mxu0 0
    %607 = vmatpush1.bf16.msra.mxu0 %v465
    %608 = vmatprep.subr.bf16.mxu0 0
    %609 = vmatpush1.bf16.msra.mxu0 %v466
    %610 = vmatprep.subr.bf16.mxu0 0
    %611 = vmatpush1.bf16.msra.mxu0 %v467
    %612 = vmatprep.mubr.bf16.mxu0 %v181
    %613 = vmatmul.mubr.bf16.gmra.mrb[0].mxu0 %v180
    %v614 = vpop.f32.mrb[0].mxu0
    %v615 = vadd.f32 %v166, %v614
    %v616 = vpop.f32.mrb[0].mxu0
    %v617 = vpop.f32.mrb[0].mxu0
    %v618 = vpop.f32.mrb[0].mxu0
    %619 = vdwg.mxu0
    %620 = vmatprep.subr.bf16.mxu0 0
    %621 = vmatpush1.bf16.msra.mxu0 %v468
    %622 = vmatprep.subr.bf16.mxu0 0
    %623 = vmatpush1.bf16.msra.mxu0 %v469
    %624 = vmatprep.subr.bf16.mxu0 0
    %625 = vmatpush1.bf16.msra.mxu0 %v470
    %626 = vmatprep.subr.bf16.mxu0 0
    %627 = vmatpush1.bf16.msra.mxu0 %v471
    %628 = vmatprep.subr.bf16.mxu0 0
    %629 = vmatpush1.bf16.msra.mxu0 %v472
    %630 = vmatprep.subr.bf16.mxu0 0
    %631 = vmatpush1.bf16.msra.mxu0 %v473
    %632 = vmatprep.subr.bf16.mxu0 0
    %633 = vmatpush1.bf16.msra.mxu0 %v474
    %634 = vmatprep.subr.bf16.mxu0 0
    %635 = vmatpush1.bf16.msra.mxu0 %v475
    %636 = vmatprep.subr.bf16.mxu0 0
    %637 = vmatpush1.bf16.msra.mxu0 %v476
    %638 = vmatprep.subr.bf16.mxu0 0
    %639 = vmatpush1.bf16.msra.mxu0 %v477
    %640 = vmatprep.subr.bf16.mxu0 0
    %641 = vmatpush1.bf16.msra.mxu0 %v478
    %642 = vmatprep.subr.bf16.mxu0 0
    %643 = vmatpush1.bf16.msra.mxu0 %v479
    %644 = vmatprep.subr.bf16.mxu0 0
    %645 = vmatpush1.bf16.msra.mxu0 %v480
    %646 = vmatprep.subr.bf16.mxu0 0
    %647 = vmatpush1.bf16.msra.mxu0 %v481
    %648 = vmatprep.subr.bf16.mxu0 0
    %649 = vmatpush1.bf16.msra.mxu0 %v482
    %650 = vmatprep.subr.bf16.mxu0 0
    %651 = vmatpush1.bf16.msra.mxu0 %v483
    %652 = vmatprep.mubr.bf16.mxu0 %v183
    %653 = vmatmul.mubr.bf16.gmra.mrb[0].mxu0 %v182
    %v654 = vpop.f32.mrb[0].mxu0
    %v655 = vadd.f32 %v615, %v654
    %v656 = vpop.f32.mrb[0].mxu0
    %v657 = vpop.f32.mrb[0].mxu0
    %v658 = vpop.f32.mrb[0].mxu0
    %659 = vdwg.mxu0
    %660 = vmatprep.subr.bf16.mxu0 0
    %661 = vmatpush1.bf16.msra.mxu0 %v484
    %662 = vmatprep.subr.bf16.mxu0 0
    %663 = vmatpush1.bf16.msra.mxu0 %v485
    %664 = vmatprep.subr.bf16.mxu0 0
    %665 = vmatpush1.bf16.msra.mxu0 %v486
    %666 = vmatprep.subr.bf16.mxu0 0
    %667 = vmatpush1.bf16.msra.mxu0 %v487
    %668 = vmatprep.subr.bf16.mxu0 0
    %669 = vmatpush1.bf16.msra.mxu0 %v488
    %670 = vmatprep.subr.bf16.mxu0 0
    %671 = vmatpush1.bf16.msra.mxu0 %v489
    %672 = vmatprep.subr.bf16.mxu0 0
    %673 = vmatpush1.bf16.msra.mxu0 %v490
    %674 = vmatprep.subr.bf16.mxu0 0
    %675 = vmatpush1.bf16.msra.mxu0 %v491
    %676 = vmatprep.subr.bf16.mxu0 0
    %677 = vmatpush1.bf16.msra.mxu0 %v492
    %678 = vmatprep.subr.bf16.mxu0 0
    %679 = vmatpush1.bf16.msra.mxu0 %v493
    %680 = vmatprep.subr.bf16.mxu0 0
    %681 = vmatpush1.bf16.msra.mxu0 %v494
    %682 = vmatprep.subr.bf16.mxu0 0
    %683 = vmatpush1.bf16.msra.mxu0 %v495
    %684 = vmatprep.subr.bf16.mxu0 0
    %685 = vmatpush1.bf16.msra.mxu0 %v496
    %686 = vmatprep.subr.bf16.mxu0 0
    %687 = vmatpush1.bf16.msra.mxu0 %v497
    %688 = vmatprep.subr.bf16.mxu0 0
    %689 = vmatpush1.bf16.msra.mxu0 %v498
    %690 = vmatprep.subr.bf16.mxu0 0
    %691 = vmatpush1.bf16.msra.mxu0 %v499
    %692 = vmatprep.mubr.bf16.mxu0 %v185
    %693 = vmatmul.mubr.bf16.gmra.mrb[0].mxu0 %v184
    %v694 = vpop.f32.mrb[0].mxu0
    %v695 = vadd.f32 %v655, %v694
    %v696 = vpop.f32.mrb[0].mxu0
    %v697 = vpop.f32.mrb[0].mxu0
    %v698 = vpop.f32.mrb[0].mxu0
    %699 = vdwg.mxu0
    %700 = vmatprep.subr.bf16.mxu0 0
    %701 = vmatpush1.bf16.msra.mxu0 %v500
    %702 = vmatprep.subr.bf16.mxu0 0
    %703 = vmatpush1.bf16.msra.mxu0 %v501
    %704 = vmatprep.subr.bf16.mxu0 0
    %705 = vmatpush1.bf16.msra.mxu0 %v502
    %706 = vmatprep.subr.bf16.mxu0 0
    %707 = vmatpush1.bf16.msra.mxu0 %v503
    %708 = vmatprep.subr.bf16.mxu0 0
    %709 = vmatpush1.bf16.msra.mxu0 %v504
    %710 = vmatprep.subr.bf16.mxu0 0
    %711 = vmatpush1.bf16.msra.mxu0 %v505
    %712 = vmatprep.subr.bf16.mxu0 0
    %713 = vmatpush1.bf16.msra.mxu0 %v506
    %714 = vmatprep.subr.bf16.mxu0 0
    %715 = vmatpush1.bf16.msra.mxu0 %v507
    %716 = vmatprep.subr.bf16.mxu0 0
    %717 = vmatpush1.bf16.msra.mxu0 %v508
    %718 = vmatprep.subr.bf16.mxu0 0
    %719 = vmatpush1.bf16.msra.mxu0 %v509
    %720 = vmatprep.subr.bf16.mxu0 0
    %721 = vmatpush1.bf16.msra.mxu0 %v510
    %722 = vmatprep.subr.bf16.mxu0 0
    %723 = vmatpush1.bf16.msra.mxu0 %v511
    %724 = vmatprep.subr.bf16.mxu0 0
    %725 = vmatpush1.bf16.msra.mxu0 %v512
    %726 = vmatprep.subr.bf16.mxu0 0
    %727 = vmatpush1.bf16.msra.mxu0 %v513
    %728 = vmatprep.subr.bf16.mxu0 0
    %729 = vmatpush1.bf16.msra.mxu0 %v514
    %730 = vmatprep.subr.bf16.mxu0 0
    %731 = vmatpush1.bf16.msra.mxu0 %v515
    %732 = vmatprep.mubr.bf16.mxu0 %v187
    %733 = vmatmul.mubr.bf16.gmra.mrb[0].mxu0 %v186
    %v734 = vpop.f32.mrb[0].mxu0
    %v735 = vadd.f32 %v695, %v734
    %v736 = vpop.f32.mrb[0].mxu0
    %v737 = vpop.f32.mrb[0].mxu0
    %v738 = vpop.f32.mrb[0].mxu0
    %739 = vdwg.mxu0
    %vm740 = vcmask 130048
    %v741 = vsel %vm740, %v735, -inf
    %742 = vmax.xlane.f32.xlu0 %v741
    %v743 = vpop.xlane.xlu0 %742
    %vm744 = vcmp.ge.f32.partialorder %v735, %v743
    %v745 = vsel %vm744, 1, 0
    %v746 = vcvt.s32.f32 %v745
    %v747 = vsel %vm740, %v746, 0.0
    %748 = vadd.xlane.f32.xlu0 %v747
    %v749 = vpop.xlane.xlu0 %748
    %v750 = vsel %vm744, -inf, %v735
    %v751 = vsel %vm740, %v750, -inf
    %752 = vmax.xlane.f32.xlu0 %v751
    %v753 = vpop.xlane.xlu0 %752
    %vm754 = vcmp.gt.f32.partialorder %v749, 1.0
    %v755 = vsel %vm754, %v743, %v753
    %v756 = vsub.f32 %v743, %v755
    %v757 = vsub.f32 %v735, %v743
    %v758 = vrcp.pop %v756
    %v759 = vmul.f32 1.0, %v758
    %v760 = vmul.f32 %v757, %v759
    %v761 = vmul.f32 %v760, 1.442695
    %v762 = vpow.pop %v761
    %v763 = vmul.f32 %v762, %v762
    %v764 = vmul.f32 %v763, %v763
    %v765 = vmul.f32 %v764, %v764
    %v766 = vmul.f32 %v765, %v763
    %v767 = vsel %vm740, %v762, 0.0
    %768 = vadd.xlane.f32.xlu0 %v767
    %v769 = vpop.xlane.xlu0 %768
    %v770 = vrcp.pop %v769
    %v771 = vmul.f32 %v762, %v770
    %v772 = vadd.f32 %v771, 0.0
    %v773 = vsel %vm740, %v766, 0.0
    %774 = vadd.xlane.f32.xlu0 %v773
    %v775 = vpop.xlane.xlu0 %774
    %v776 = vrcp.pop %v775
    %v777 = vmul.f32 %v766, %v776
    %v778 = vadd.f32 %v777, 0.0
    %vm779 = vcmask 261248
    %v780 = vsel %vm779, %v735, -inf
    %781 = vmax.xlane.f32.xlu0 %v780
    %v782 = vpop.xlane.xlu0 %781
    %vm783 = vcmp.ge.f32.partialorder %v735, %v782
    %v784 = vsel %vm783, 1, 0
    %v785 = vcvt.s32.f32 %v784
    %787 = vrot.lane.b32.xlu0 %v785, 112
    %v788 = vpop.permute.xlu0 %787
    %v790 = vsel %vm740, %v788, 0.0
    %791 = vadd.xlane.f32.xlu0 %v790
    %v792 = vpop.xlane.xlu0 %791
    %v793 = vsel %vm783, -inf, %v735
    %v794 = vsel %vm779, %v793, -inf
    %795 = vmax.xlane.f32.xlu0 %v794
    %v796 = vpop.xlane.xlu0 %795
    %vm797 = vcmp.gt.f32.partialorder %v792, 1.0
    %v798 = vsel %vm797, %v782, %v796
    %v799 = vsub.f32 %v782, %v798
    %v800 = vsub.f32 %v735, %v782
    %v801 = vrcp.pop %v799
    %v802 = vmul.f32 1.0, %v801
    %v803 = vmul.f32 %v800, %v802
    %v804 = vmul.f32 %v803, 1.442695
    %v805 = vpow.pop %v804
    %v806 = vmul.f32 %v805, %v805
    %v807 = vmul.f32 %v806, %v806
    %v808 = vmul.f32 %v807, %v807
    %v809 = vmul.f32 %v808, %v806
    %811 = vrot.lane.b32.xlu0 %v805, 112
    %v812 = vpop.permute.xlu0 %811
    %v814 = vsel %vm740, %v812, 0.0
    %815 = vadd.xlane.f32.xlu0 %v814
    %v816 = vpop.xlane.xlu0 %815
    %v817 = vrcp.pop %v816
    %v818 = vmul.f32 %v805, %v817
    %820 = vrot.lane.b32.xlu0 %v818, 112
    %v821 = vpop.permute.xlu0 %820
    %v823 = vadd.f32 %v772, %v821
    %825 = vrot.lane.b32.xlu0 %v809, 112
    %v826 = vpop.permute.xlu0 %825
    %v828 = vsel %vm740, %v826, 0.0
    %829 = vadd.xlane.f32.xlu0 %v828
    %v830 = vpop.xlane.xlu0 %829
    %v831 = vrcp.pop %v830
    %v832 = vmul.f32 %v809, %v831
    %834 = vrot.lane.b32.xlu0 %v832, 112
    %v835 = vpop.permute.xlu0 %834
    %v837 = vadd.f32 %v778, %v835
    %vm838 = vcmask 392448
    %v839 = vsel %vm838, %v735, -inf
    %840 = vmax.xlane.f32.xlu0 %v839
    %v841 = vpop.xlane.xlu0 %840
    %vm842 = vcmp.ge.f32.partialorder %v735, %v841
    %v843 = vsel %vm842, 1, 0
    %v844 = vcvt.s32.f32 %v843
    %846 = vrot.lane.b32.xlu0 %v844, 96
    %v847 = vpop.permute.xlu0 %846
    %v849 = vsel %vm740, %v847, 0.0
    %850 = vadd.xlane.f32.xlu0 %v849
    %v851 = vpop.xlane.xlu0 %850
    %v852 = vsel %vm842, -inf, %v735
    %v853 = vsel %vm838, %v852, -inf
    %854 = vmax.xlane.f32.xlu0 %v853
    %v855 = vpop.xlane.xlu0 %854
    %vm856 = vcmp.gt.f32.partialorder %v851, 1.0
    %v857 = vsel %vm856, %v841, %v855
    %v858 = vsub.f32 %v841, %v857
    %v859 = vsub.f32 %v735, %v841
    %v860 = vrcp.pop %v858
    %v861 = vmul.f32 1.0, %v860
    %v862 = vmul.f32 %v859, %v861
    %v863 = vmul.f32 %v862, 1.442695
    %v864 = vpow.pop %v863
    %v865 = vmul.f32 %v864, %v864
    %v866 = vmul.f32 %v865, %v865
    %v867 = vmul.f32 %v866, %v866
    %v868 = vmul.f32 %v867, %v865
    %870 = vrot.lane.b32.xlu0 %v864, 96
    %v871 = vpop.permute.xlu0 %870
    %v873 = vsel %vm740, %v871, 0.0
    %874 = vadd.xlane.f32.xlu0 %v873
    %v875 = vpop.xlane.xlu0 %874
    %v876 = vrcp.pop %v875
    %v877 = vmul.f32 %v864, %v876
    %879 = vrot.lane.b32.xlu0 %v877, 96
    %v880 = vpop.permute.xlu0 %879
    %v882 = vadd.f32 %v823, %v880
    %884 = vrot.lane.b32.xlu0 %v868, 96
    %v885 = vpop.permute.xlu0 %884
    %v887 = vsel %vm740, %v885, 0.0
    %888 = vadd.xlane.f32.xlu0 %v887
    %v889 = vpop.xlane.xlu0 %888
    %v890 = vrcp.pop %v889
    %v891 = vmul.f32 %v868, %v890
    %893 = vrot.lane.b32.xlu0 %v891, 96
    %v894 = vpop.permute.xlu0 %893
    %v896 = vadd.f32 %v837, %v894
    %v897 = vmul.f32 %v882, 0.33333334
    %v898 = vmax.f32 %v897, 0.0
    %v899 = vlog2.pop %v898
    %v900 = vmul.f32 %v899, 0.6931472
    %v901 = vmul.f32 %v896, 0.33333334
    %v902 = vmax.f32 %v901, 0.0
    %v903 = vlog2.pop %v902
    %v904 = vmul.f32 %v903, 0.6931472
    %906 = vrot.lane.b32.xlu0 %v900, 48
    %v907 = vpop.permute.xlu0 %906
    %910 = vrot.lane.b32.xlu0 %v904, 64
    %v911 = vpop.permute.xlu0 %910
    %vm913 = vcmask 392192
    %v914 = vsel %vm913, %v735, %v907
    %vm915 = vcmask 523264
    %v916 = vsel %vm915, %v914, %v911
    %vm917 = vcmask 654336
    %v918 = vsel %vm917, %v916, 0.0
    %919 = vst [vmem:[%s3] sm:$0xff] %v918
    // Predicated region
    $region18: #{ensemble_forward.1} parent=1 // pred_check
      _
    $region19: #{ensemble_forward.1} parent=1 // pred_check_branch
      %921 = sbr.rel (0) target = $region21
    $region20: #{ensemble_forward.1} parent=1 // pred_region
      _
    $region21: #{ensemble_forward.1} parent=1 // pred_fallthru
      _
    // Predicated region
    $region22: #{ensemble_forward.1} parent=1 // pred_check
      _
    $region23: #{ensemble_forward.1} parent=1 // pred_check_branch
      %923 = sbr.rel (0) target = $region25
    $region24: #{ensemble_forward.1} parent=1 // pred_region
      _
    $region25: #{ensemble_forward.1} parent=1 // pred_fallthru
      _
    %924 = vsyncpa [#allocation3], 1

</llo_original>
